<compile_context>
chip_gen: v7x
topology: tpu7x:2x2x1
jax: 0.10.0
libtpu: 0.0.40
codegen_flags: <defaults>
</compile_context>

<pallas_src>
import functools

import jax
import jax.numpy as jnp
import numpy as np
from jax.experimental import pallas as pl
from jax.experimental.pallas import tpu as pltpu


def _round_up(x, m):
    return ((x + m - 1) // m) * m


def _conv_mm_bias_relu_kernel(p_ref, w_ref, b_ref, o_ref):
    # p_ref: (TM, K_PAD)        im2col patch rows for this grid step (K on lanes)
    # w_ref: (COUT_PAD, K_PAD)  weights, K on lanes (lane-dense RHS, no wrapper transpose)
    # b_ref: (1, COUT_PAD)      bias row, broadcast over the TM rows
    # o_ref: (TM, COUT_PAD)     lane-dense output (>=128 lanes -> unmasked stores)
    acc = jax.lax.dot_general(
        p_ref[...], w_ref[...],
        dimension_numbers=(((1,), (1,)), ((), ())),   # contract K with K
        preferred_element_type=jnp.float32)
    acc = acc + b_ref[...].astype(jnp.float32)
    o_ref[...] = jnp.maximum(acc, 0.0).astype(o_ref.dtype)


@functools.partial(jax.jit, static_argnames=("stride",))
def conv2d_relu_pallas(x, weight, bias, *, stride):
    """Equivalent of F.relu(nn.Conv2d(...)(x)); NCHW in, NCHW out (PyTorch parity)."""
    N, C, H, W = x.shape
    Cout, Cin, KH, KW = weight.shape
    assert Cin == C
    OH = (H - KH) // stride + 1
    OW = (W - KW) // stride + 1

    K = C * KH * KW
    M = N * OH * OW

    # im2col in one XLA op.  Output layout NHWC -> (N, OH, OW, K); the feature axis is
    # ordered (c, kh, kw), which matches weight.reshape(Cout, C*KH*KW) from OIHW.
    patches = jax.lax.conv_general_dilated_patches(
        x, (KH, KW), (stride, stride), "VALID",
        dimension_numbers=("NCHW", "OIHW", "NHWC"))
    patches = patches.reshape(M, K)

    # Lane-dense padding targets.
    COUT_PAD = _round_up(Cout, 128)
    K_PAD = _round_up(K, 128)

    # Rows-per-block tile; pad M once to a whole number of tiles.
    TM = 512
    tm = min(TM, _round_up(M, 8))
    M_pad = _round_up(M, tm)
    grid_m = M_pad // tm

    if (M_pad != M) or (K_PAD != K):
        patches = jnp.pad(patches, ((0, M_pad - M), (0, K_PAD - K)))

    # Weights stay (Cout, K): K on the lane axis; zero-pad Cout/K (zeros contribute 0).
    w_mat = weight.reshape(Cout, K)
    if (COUT_PAD != Cout) or (K_PAD != K):
        w_mat = jnp.pad(w_mat, ((0, COUT_PAD - Cout), (0, K_PAD - K)))
    b_mat = jnp.pad(bias.reshape(1, Cout), ((0, 0), (0, COUT_PAD - Cout)))

    itemsize = np.dtype(x.dtype).itemsize
    cost = pl.CostEstimate(
        flops=2 * M_pad * K_PAD * COUT_PAD,
        transcendentals=0,
        bytes_accessed=(M_pad * K_PAD + COUT_PAD * K_PAD + COUT_PAD
                        + M_pad * COUT_PAD) * itemsize)

    out = pl.pallas_call(
        _conv_mm_bias_relu_kernel,
        out_shape=jax.ShapeDtypeStruct((M_pad, COUT_PAD), x.dtype),
        grid=(grid_m,),
        in_specs=[
            pl.BlockSpec((tm, K_PAD), lambda i: (i, 0)),
            pl.BlockSpec((COUT_PAD, K_PAD), lambda i: (0, 0)),
            pl.BlockSpec((1, COUT_PAD), lambda i: (0, 0)),
        ],
        out_specs=pl.BlockSpec((tm, COUT_PAD), lambda i: (i, 0)),
        compiler_params=pltpu.CompilerParams(
            dimension_semantics=("parallel",),
            vmem_limit_bytes=32 * 1024 * 1024),
        cost_estimate=cost,
    )(patches, w_mat, b_mat)

    out = out[:M, :Cout].reshape(N, OH, OW, Cout)   # drop row / lane padding
    return jnp.transpose(out, (0, 3, 1, 2))         # caller (PyTorch parity) wants NCHW


if __name__ == "__main__":
    # Small, module-consistent shapes: batch=2, in_channels=4, spatial=16x16.
    # cnn1: Conv2d(in=4, out=32, kernel=8, stride=4) -> output (2, 32, 3, 3)
    N, C, H, W = 2, 4, 16, 16
    COUT, KH, KW, STRIDE = 32, 8, 8, 4

    key = jax.random.PRNGKey(0)
    kx, kw_, kb = jax.random.split(key, 3)

    x = jax.random.normal(kx, (N, C, H, W), dtype=jnp.float32)

    # Deterministic PyTorch-style init: U(-bound, bound), bound = 1/sqrt(fan_in)
    fan_in = C * KH * KW
    bound = 1.0 / np.sqrt(fan_in)
    weight = jax.random.uniform(kw_, (COUT, C, KH, KW), jnp.float32, -bound, bound)
    bias = jax.random.uniform(kb, (COUT,), jnp.float32, -bound, bound)

    y = conv2d_relu_pallas(x, weight, bias, stride=STRIDE)
    y = jax.block_until_ready(y)

    # Sanity check against XLA's native conv + relu (same NCHW semantics).
    ref = jax.lax.conv_general_dilated(
        x, weight, window_strides=(STRIDE, STRIDE), padding="VALID",
        dimension_numbers=("NCHW", "OIHW", "NCHW"))
    ref = jnp.maximum(ref + bias[None, :, None, None], 0.0)
    np.testing.assert_allclose(np.asarray(y), np.asarray(ref), rtol=1e-5, atol=1e-5)

    print("KERNEL_OK")
</pallas_src>

<mosaic_0001>
module attributes {stable_mosaic.version = 11 : i64} {
  func.func @_conv_mm_bias_relu_kernel(%arg0: i32, %arg1: memref<24x256xf32, #tpu.memory_space<vmem>>, %arg2: memref<128x256xf32, #tpu.memory_space<vmem>>, %arg3: memref<1x128xf32, #tpu.memory_space<vmem>>, %arg4: memref<24x128xf32, #tpu.memory_space<vmem>>) attributes {dimension_semantics = [#tpu.dimension_semantics<parallel>], iteration_bounds = array<i64: 1>, scalar_prefetch = 0 : i64, scratch_operands = 0 : i64, tpu.core_type = #tpu.core_type<tc>, window_params = [{transform_indices = @transform_0, window_bounds = array<i64: 24, 256>}, {pipeline_mode = #tpu.pipeline_mode<synchronous>, transform_indices = @transform_1, window_bounds = array<i64: 128, 256>}, {pipeline_mode = #tpu.pipeline_mode<synchronous>, transform_indices = @transform_2, window_bounds = array<i64: 1, 128>}, {transform_indices = @transform_3, window_bounds = array<i64: 24, 128>}]} {
    %c0 = arith.constant 0 : index
    %c0_0 = arith.constant 0 : index
    %0 = vector.load %arg1[%c0, %c0_0] : memref<24x256xf32, #tpu.memory_space<vmem>>, vector<24x256xf32>
    %c0_1 = arith.constant 0 : index
    %c0_2 = arith.constant 0 : index
    %1 = vector.load %arg2[%c0_1, %c0_2] : memref<128x256xf32, #tpu.memory_space<vmem>>, vector<128x256xf32>
    %cst = arith.constant dense<0.000000e+00> : vector<24x128xf32>
    %2 = tpu.matmul %0, %1, %cst {dimension_numbers = #tpu.dot_dimension_numbers<[1], [1], [0], [0], [0, 0, 1, 0], [], []>} : vector<24x256xf32>, vector<128x256xf32>, vector<24x128xf32> -> vector<24x128xf32>
    %c0_3 = arith.constant 0 : index
    %c0_4 = arith.constant 0 : index
    %3 = vector.load %arg3[%c0_3, %c0_4] : memref<1x128xf32, #tpu.memory_space<vmem>>, vector<1x128xf32>
    %4 = vector.broadcast %3 : vector<1x128xf32> to vector<24x128xf32>
    %5 = arith.addf %2, %4 : vector<24x128xf32>
    %cst_5 = arith.constant 0.000000e+00 : f32
    %6 = vector.broadcast %cst_5 : f32 to vector<24x128xf32>
    %7 = arith.maximumf %5, %6 : vector<24x128xf32>
    %c0_6 = arith.constant 0 : index
    %c0_7 = arith.constant 0 : index
    %8 = vector.load %arg4[%c0_6, %c0_7] : memref<24x128xf32, #tpu.memory_space<vmem>>, vector<24x128xf32>
    tpu.vector_store %arg4[%c0_6, %c0_7], %7 {strides = array<i32>} : memref<24x128xf32, #tpu.memory_space<vmem>>, vector<24x128xf32>,
    return
  }
  func.func @transform_0(%arg0: i32) -> (i32, i32) {
    %c0_i32 = arith.constant 0 : i32
    %c0_i32_0 = arith.constant 0 : i32
    return %arg0, %c0_i32 : i32, i32
  }
  func.func @transform_1(%arg0: i32) -> (i32, i32) {
    %c0_i32 = arith.constant 0 : i32
    %c0_i32_0 = arith.constant 0 : i32
    %c0_i32_1 = arith.constant 0 : i32
    return %c0_i32, %c0_i32_0 : i32, i32
  }
  func.func @transform_2(%arg0: i32) -> (i32, i32) {
    %c0_i32 = arith.constant 0 : i32
    %c0_i32_0 = arith.constant 0 : i32
    %c0_i32_1 = arith.constant 0 : i32
    return %c0_i32, %c0_i32_0 : i32, i32
  }
  func.func @transform_3(%arg0: i32) -> (i32, i32) {
    %c0_i32 = arith.constant 0 : i32
    %c0_i32_0 = arith.constant 0 : i32
    return %arg0, %c0_i32 : i32, i32
  }
}

</mosaic_0001>

<llo_original>
// kernel: conv2d_relu_pallas.1
$region0: #{conv2d_relu_pallas.1}
  #allocation0 [shape = 'u32[]', space=smem, size = 0x4, offset = 0x4, fixed_abs, tag = 'smem constant byte address 0x4 - core index']
  #allocation1 [shape = 'u32[144,128]{1,0:T(1,128)}', space=vmem, size = 0x12000, scoped, tag = 'internal scratch']
  %s0 = inlined_call_operand.vmem [shape: f32[24,256], index: 0, kind: input, shape index: {}]
  %s1 = inlined_call_operand.vmem [shape: f32[128,256], index: 1, kind: input, shape index: {}]
  %s2 = inlined_call_operand.vmem [shape: f32[1,128], index: 2, kind: input, shape index: {}]
  %s3 = inlined_call_operand.vmem [shape: f32[24,128], index: 3, kind: output, shape index: {}]
  %s4 = sld [smem:[#allocation0]]
  $region22: #{conv2d_relu_pallas.1} parent=0
    _
  %s6 = ssub.s32 1, %s4
  %s7 = scalar_select 0, %s6, %s4
  // Predicated region
  $region2: #{conv2d_relu_pallas.1} parent=0 // pred_check
    _
  $region3: #{conv2d_relu_pallas.1} parent=0 // pred_check_branch
    %9 = sbr.rel (0) target = $region5
  $region4: #{conv2d_relu_pallas.1} parent=0 // pred_region
    _
  $region5: #{conv2d_relu_pallas.1} parent=0 // pred_fallthru
    _
  // Predicated region
  $region6: #{conv2d_relu_pallas.1} parent=0 // pred_check
    _
  $region7: #{conv2d_relu_pallas.1} parent=0 // pred_check_branch
    %11 = sbr.rel (0) target = $region9
  $region8: #{conv2d_relu_pallas.1} parent=0 // pred_region
    _
  $region9: #{conv2d_relu_pallas.1} parent=0 // pred_fallthru
    _
  // Predicated region
  $region10: #{conv2d_relu_pallas.1} parent=0 // pred_check
    _
  $region11: #{conv2d_relu_pallas.1} parent=0 // pred_check_branch
    %13 = sbr.rel (0) target = $region13
  $region12: #{conv2d_relu_pallas.1} parent=0 // pred_region
    _
  $region13: #{conv2d_relu_pallas.1} parent=0 // pred_fallthru
    _
  %v14 = vld [vmem:[%s0] sm:$0xff]
  %v15 = vld [vmem:[%s0 + $0x8] sm:$0xff]
  %v16 = vld [vmem:[%s0 + $0x10] sm:$0xff]
  %v17 = vld [vmem:[%s0 + $0x18] sm:$0xff]
  %v18 = vld [vmem:[%s0 + $0x20] sm:$0xff]
  %v19 = vld [vmem:[%s0 + $0x28] sm:$0xff]
  %v20 = vld [vmem:[%s1] sm:$0xff]
  %v21 = vld [vmem:[%s1 + $0x8] sm:$0xff]
  %v22 = vld [vmem:[%s1 + $0x10] sm:$0xff]
  %v23 = vld [vmem:[%s1 + $0x18] sm:$0xff]
  %v24 = vld [vmem:[%s1 + $0x20] sm:$0xff]
  %v25 = vld [vmem:[%s1 + $0x28] sm:$0xff]
  %v26 = vld [vmem:[%s1 + $0x30] sm:$0xff]
  %v27 = vld [vmem:[%s1 + $0x38] sm:$0xff]
  %v28 = vld [vmem:[%s1 + $0x40] sm:$0xff]
  %v29 = vld [vmem:[%s1 + $0x48] sm:$0xff]
  %v30 = vld [vmem:[%s1 + $0x50] sm:$0xff]
  %v31 = vld [vmem:[%s1 + $0x58] sm:$0xff]
  %v32 = vld [vmem:[%s1 + $0x60] sm:$0xff]
  %v33 = vld [vmem:[%s1 + $0x68] sm:$0xff]
  %v34 = vld [vmem:[%s1 + $0x70] sm:$0xff]
  %v35 = vld [vmem:[%s1 + $0x78] sm:$0xff]
  %v36 = vld [vmem:[%s1 + $0x80] sm:$0xff]
  %v37 = vld [vmem:[%s1 + $0x88] sm:$0xff]
  %v38 = vld [vmem:[%s1 + $0x90] sm:$0xff]
  %v39 = vld [vmem:[%s1 + $0x98] sm:$0xff]
  %v40 = vld [vmem:[%s1 + $0xa0] sm:$0xff]
  %v41 = vld [vmem:[%s1 + $0xa8] sm:$0xff]
  %v42 = vld [vmem:[%s1 + $0xb0] sm:$0xff]
  %v43 = vld [vmem:[%s1 + $0xb8] sm:$0xff]
  %v44 = vld [vmem:[%s1 + $0xc0] sm:$0xff]
  %v45 = vld [vmem:[%s1 + $0xc8] sm:$0xff]
  %v46 = vld [vmem:[%s1 + $0xd0] sm:$0xff]
  %v47 = vld [vmem:[%s1 + $0xd8] sm:$0xff]
  %v48 = vld [vmem:[%s1 + $0xe0] sm:$0xff]
  %v49 = vld [vmem:[%s1 + $0xe8] sm:$0xff]
  %v50 = vld [vmem:[%s1 + $0xf0] sm:$0xff]
  %v51 = vld [vmem:[%s1 + $0xf8] sm:$0xff]
  %v52 = vld [vmem:[%s2] sm:$0x1]
  %v54 = vlaneseq
  %v55 = vshrl.u32 %v54, 7
  %v56 = vsub.s32 0, %v55
  %v57 = vrot.slane %v52, %v56
  %59 = vmatprep.subr.mxu0 %v21
  %60 = vmatpush1.xpose.msra.mxu0 %v20
  %61 = vmatprep.subr.mxu0 %v23
  %62 = vmatpush1.xpose.msra.mxu0 %v22
  %63 = vmatprep.subr.mxu0 %v25
  %64 = vmatpush1.xpose.msra.mxu0 %v24
  %65 = vmatprep.subr.mxu0 %v27
  %66 = vmatpush1.xpose.msra.mxu0 %v26
  %67 = vmatprep.subr.mxu0 %v29
  %68 = vmatpush1.xpose.msra.mxu0 %v28
  %69 = vmatprep.subr.mxu0 %v31
  %70 = vmatpush1.xpose.msra.mxu0 %v30
  %71 = vmatprep.subr.mxu0 %v33
  %72 = vmatpush1.xpose.msra.mxu0 %v32
  %73 = vmatprep.subr.mxu0 %v35
  %74 = vmatpush1.xpose.msra.mxu0 %v34
  %75 = vmatprep.subr.mxu0 %v37
  %76 = vmatpush1.xpose.msra.mxu0 %v36
  %77 = vmatprep.subr.mxu0 %v39
  %78 = vmatpush1.xpose.msra.mxu0 %v38
  %79 = vmatprep.subr.mxu0 %v41
  %80 = vmatpush1.xpose.msra.mxu0 %v40
  %81 = vmatprep.subr.mxu0 %v43
  %82 = vmatpush1.xpose.msra.mxu0 %v42
  %83 = vmatprep.subr.mxu0 %v45
  %84 = vmatpush1.xpose.msra.mxu0 %v44
  %85 = vmatprep.subr.mxu0 %v47
  %86 = vmatpush1.xpose.msra.mxu0 %v46
  %87 = vmatprep.subr.mxu0 %v49
  %88 = vmatpush1.xpose.msra.mxu0 %v48
  %89 = vmatprep.subr.mxu0 %v51
  %90 = vmatpush1.xpose.msra.mxu0 %v50
  %91 = vmatprep.subr.mxu0 0.0
  %92 = vmatpush1.xpose.msra.mxu0 0.0
  %93 = vmatprep.subr.mxu0 0.0
  %94 = vmatpush1.xpose.msra.mxu0 0.0
  %95 = vmatprep.subr.mxu0 0.0
  %96 = vmatpush1.xpose.msra.mxu0 0.0
  %97 = vmatprep.subr.mxu0 0.0
  %98 = vmatpush1.xpose.msra.mxu0 0.0
  %99 = vmatprep.subr.mxu0 0.0
  %100 = vmatpush1.xpose.msra.mxu0 0.0
  %101 = vmatprep.subr.mxu0 0.0
  %102 = vmatpush1.xpose.msra.mxu0 0.0
  %103 = vmatprep.subr.mxu0 0.0
  %104 = vmatpush1.xpose.msra.mxu0 0.0
  %105 = vmatprep.subr.mxu0 0.0
  %106 = vmatpush1.xpose.msra.mxu0 0.0
  %107 = vmatprep.subr.mxu0 0.0
  %108 = vmatpush1.xpose.msra.mxu0 0.0
  %109 = vmatprep.subr.mxu0 0.0
  %110 = vmatpush1.xpose.msra.mxu0 0.0
  %111 = vmatprep.subr.mxu0 0.0
  %112 = vmatpush1.xpose.msra.mxu0 0.0
  %113 = vmatprep.subr.mxu0 0.0
  %114 = vmatpush1.xpose.msra.mxu0 0.0
  %115 = vmatprep.subr.mxu0 0.0
  %116 = vmatpush1.xpose.msra.mxu0 0.0
  %117 = vmatprep.subr.mxu0 0.0
  %118 = vmatpush1.xpose.msra.mxu0 0.0
  %119 = vmatprep.subr.mxu0 0.0
  %120 = vmatpush1.xpose.msra.mxu0 0.0
  %121 = vmatprep.subr.mxu0 0.0
  %122 = vmatpush1.xpose.msra.mxu0 0.0
  %123 = vmatprep.mubr.f32.mxu0 %v15
  %124 = vmatmul.mubr.f32.gmra.mrb[0].mxu0 %v14
  %v125 = vpop.f32.mrb[0].mxu0
  %v126 = vadd.f32 %v57, %v125
  %v127 = vpop.f32.mrb[0].mxu0
  %128 = vmatprep.mubr.f32.mxu0 %v17
  %129 = vmatmul.mubr.f32.gmra.mrb[0].mxu0 %v16
  %v130 = vpop.f32.mrb[0].mxu0
  %v131 = vadd.f32 %v57, %v130
  %v132 = vpop.f32.mrb[0].mxu0
  %133 = vmatprep.mubr.f32.mxu0 %v19
  %134 = vmatmul.mubr.f32.gmra.mrb[0].mxu0 %v18
  %v135 = vpop.f32.mrb[0].mxu0
  %v136 = vadd.f32 %v57, %v135
  %v137 = vpop.f32.mrb[0].mxu0
  %138 = vdwg.mxu0
  %v139 = vmax.f32 %v126, 0.0
  %v140 = vmax.f32 %v131, 0.0
  %v141 = vmax.f32 %v136, 0.0
  %142 = vst [vmem:[%s3] sm:$0xff] %v139
  %143 = vst [vmem:[%s3 + $0x8] sm:$0xff] %v140
  %144 = vst [vmem:[%s3 + $0x10] sm:$0xff] %v141
  // Predicated region
  $region14: #{conv2d_relu_pallas.1} parent=0 // pred_check
    _
  $region15: #{conv2d_relu_pallas.1} parent=0 // pred_check_branch
    %146 = sbr.rel (0) target = $region17
  $region16: #{conv2d_relu_pallas.1} parent=0 // pred_region
    _
  $region17: #{conv2d_relu_pallas.1} parent=0 // pred_fallthru
    _
  // Predicated region
  $region18: #{conv2d_relu_pallas.1} parent=0 // pred_check
    _
  $region19: #{conv2d_relu_pallas.1} parent=0 // pred_check_branch
    %148 = sbr.rel (0) target = $region21
  $region20: #{conv2d_relu_pallas.1} parent=0 // pred_region
    _
  $region21: #{conv2d_relu_pallas.1} parent=0 // pred_fallthru
    _

</llo_original>
